<compile_context>
chip_gen: v6e
topology: v6e:2x2x1
jax: 0.10.0
libtpu: 0.0.40
codegen_flags: <defaults>
</compile_context>

<pallas_src>
import jax
import jax.numpy as jnp
from jax.experimental import pallas as pl
from jax.experimental.pallas import tpu as pltpu


_NEG_FILL = -1e30  # folded shift for padded gene columns -> exp() underflows to 0


def _decoder_kernel(z_ref, ws_ref, wd_ref, gvec_ref, rowvec_ref,
                    px_scale_ref, px_rate_ref, px_dropout_ref):
    """One batch tile: two matmuls + BN shift + softmax + rate epilogue.

    Shapes (per grid step):
      z_ref      : (TB, n_in_pad)     bf16/f32
      ws_ref     : (n_in_pad, G_pad)  bf16/f32  -- W_scale   * bn_s_scale (folded)
      wd_ref     : (n_in_pad, G_pad)  bf16/f32  -- W_dropout * bn_d_scale (folded)
      gvec_ref   : (8, G_pad)         f32  -- row0=bn_s_shift (pad=-1e30),
                                              row1=bn_d_shift, row2=gene_offset
      rowvec_ref : (TB, 2)            f32  -- col0=library, col1=cell_offset
      outputs    : (TB, G_pad)
    """
    z = z_ref[...]

    # --- px_dropout half first: compute, shift, store, free its accumulator --
    acts_d = jnp.dot(z, wd_ref[...], preferred_element_type=jnp.float32)
    px_dropout_ref[...] = (acts_d + gvec_ref[1:2, :]).astype(px_dropout_ref.dtype)

    # --- scale half: matmul + BN shift (scale already folded into weights) ---
    raw = jnp.dot(z, ws_ref[...], preferred_element_type=jnp.float32)
    raw = raw + gvec_ref[0:1, :]        # padded gene columns carry -1e30 here

    # numerically stable softmax over the full gene row (whole axis in 1 block)
    m = jnp.max(raw, axis=-1, keepdims=True)
    e = jnp.exp(raw - m)
    denom = jnp.sum(e, axis=-1, keepdims=True)
    px_scale = e * pl.reciprocal(denom, approx=False)
    px_scale_ref[...] = px_scale.astype(px_scale_ref.dtype)

    # --- px_rate = exp(library) * cell_offset * px_scale * gene_offset -------
    rv = rowvec_ref[...]                                   # (TB, 2)
    row_fac = jnp.exp(rv[:, 0:1]) * rv[:, 1:2]             # (TB, 1), once per row
    px_rate_ref[...] = (px_scale * row_fac * gvec_ref[2:3, :]).astype(
        px_rate_ref.dtype)


def _round_up(x, m):
    return ((x + m - 1) // m) * m


def _pad1(v, n, fill=0.0):
    v = v.reshape(-1).astype(jnp.float32)
    pad = n - v.shape[0]
    return v if pad == 0 else jnp.pad(v, (0, pad), constant_values=fill)


def _pad2(a, rows, cols):
    a = a.astype(jnp.float32)
    pr, pc = rows - a.shape[0], cols - a.shape[1]
    return a if (pr == 0 and pc == 0) else jnp.pad(a, ((0, pr), (0, pc)))


def _vmem_estimate(tb, n_in_pad, g_pad, mm_bytes, single_buffer_resident):
    wf = 1 if single_buffer_resident else 2
    return (2 * tb * n_in_pad * mm_bytes            # z tile (double-buffered)
            + wf * 2 * n_in_pad * g_pad * mm_bytes  # two resident weight slabs
            + wf * 8 * g_pad * 4                    # resident per-gene slab
            + 2 * tb * 128 * 4                      # per-cell slab (lane-padded)
            + 3 * 2 * tb * g_pad * 4                # 3 outputs, double-buffered
            + 4 * tb * g_pad * 4)                   # in-kernel temporaries


def linear_decoder_scvi_gene_cell(z, w_scale, w_dropout,
                                  bn_s_scale, bn_s_shift,
                                  bn_d_scale, bn_d_shift,
                                  library, cell_offset, gene_offset,
                                  *,
                                  use_bf16_matmul=True,
                                  secondary_out_dtype=jnp.float32,
                                  trim_outputs=True):
    """Returns (px_scale, px_r, px_rate, px_dropout).  Weights are (n_in, n_out)."""
    B, n_in = z.shape
    n_out = w_scale.shape[1]

    n_in_pad = _round_up(n_in, 16)      # bf16 native sublane tile is (16, 128)
    g_pad = _round_up(n_out, 128)

    mm_dtype = jnp.bfloat16 if use_bf16_matmul else jnp.float32
    mm_bytes = 2 if use_bf16_matmul else 4

    # --- per-chip batch tile + VMEM budget -----------------------------------
    try:
        kind = jax.devices()[0].device_kind.lower()
    except Exception:
        kind = ""
    try:
        vmem_cap = pltpu.get_tpu_info().vmem_capacity_bytes
    except Exception:
        # generation-aware fallback: v7x has 64 MiB per TensorCore
        vmem_cap = (64 if "v7" in kind else 128) * 1024 * 1024
    budget = int(vmem_cap * 0.75)

    # memory-bound kernel: use a big tile on all generations (incl. v5e)
    tb = max(8, min(256, _round_up(B, 8)))
    # v7x megacore: force >= 2 grid steps so ("parallel",) shards across both TCs
    if "v7" in kind:
        b8 = _round_up(B, 8)
        if b8 >= 16:
            tb = min(tb, _round_up(b8 // 2, 8))
    while tb > 8 and _vmem_estimate(tb, n_in_pad, g_pad, mm_bytes, True) > budget:
        tb = max(8, _round_up(tb // 2, 8))
    b_pad = _round_up(B, tb)
    grid = (b_pad // tb,)

    # --- pack operands --------------------------------------------------------
    z_p = jnp.zeros((b_pad, n_in_pad), jnp.float32).at[:B, :n_in].set(
        z.astype(jnp.float32)).astype(mm_dtype)

    # Fold eval-mode BN scale into the weight columns (one-time pack, not per
    # grid step).  The -1e30 pad mask stays in the shift path only.
    ws_folded = w_scale.astype(jnp.float32) * bn_s_scale.reshape(1, -1).astype(jnp.float32)
    wd_folded = w_dropout.astype(jnp.float32) * bn_d_scale.reshape(1, -1).astype(jnp.float32)
    ws_p = _pad2(ws_folded, n_in_pad, g_pad).astype(mm_dtype)
    wd_p = _pad2(wd_folded, n_in_pad, g_pad).astype(mm_dtype)

    # per-gene slab: row0 = BN_s shift (pad=-1e30), row1 = BN_d shift, row2 = gene_offset
    gvec = (jnp.zeros((8, g_pad), jnp.float32)
            .at[0].set(_pad1(bn_s_shift, g_pad, _NEG_FILL))
            .at[1].set(_pad1(bn_d_shift, g_pad, 0.0))
            .at[2].set(_pad1(gene_offset, g_pad, 0.0)))

    # per-cell slab: col0 = library, col1 = cell_offset
    rowvec = (jnp.zeros((b_pad, 2), jnp.float32)
              .at[:B, 0].set(library.reshape(B).astype(jnp.float32))
              .at[:B, 1].set(cell_offset.reshape(B).astype(jnp.float32)))

    out_shapes = [
        jax.ShapeDtypeStruct((b_pad, g_pad), jnp.float32),          # px_scale
        jax.ShapeDtypeStruct((b_pad, g_pad), secondary_out_dtype),  # px_rate
        jax.ShapeDtypeStruct((b_pad, g_pad), secondary_out_dtype),  # px_dropout
    ]

    sec_bytes = jnp.dtype(secondary_out_dtype).itemsize
    cost = pl.CostEstimate(
        flops=4 * b_pad * n_in_pad * g_pad,                   # two (TB,K)x(K,G) matmuls
        transcendentals=b_pad * (g_pad + 2),                  # softmax exp + exp(library)
        bytes_accessed=int(b_pad * n_in_pad * mm_bytes
                           + 2 * n_in_pad * g_pad * mm_bytes
                           + 8 * g_pad * 4 + b_pad * 2 * 4
                           + b_pad * g_pad * (4 + 2 * sec_bytes)))

    def _invoke(single_buffer_resident):
        resident_kw = ({"pipeline_mode": pl.Buffered(1)}
                       if single_buffer_resident else {})
        in_specs = [
            pl.BlockSpec((tb, n_in_pad), lambda i: (i, 0)),                    # z tile
            pl.BlockSpec((n_in_pad, g_pad), lambda i: (0, 0), **resident_kw),  # W_scale (resident)
            pl.BlockSpec((n_in_pad, g_pad), lambda i: (0, 0), **resident_kw),  # W_dropout (resident)
            pl.BlockSpec((8, g_pad), lambda i: (0, 0), **resident_kw),         # per-gene slab
            pl.BlockSpec((tb, 2), lambda i: (i, 0)),                           # per-cell slab
        ]
        out_spec = pl.BlockSpec((tb, g_pad), lambda i: (i, 0))
        est = _vmem_estimate(tb, n_in_pad, g_pad, mm_bytes, single_buffer_resident)
        vmem_limit = min(budget, max(est + (4 << 20), 16 << 20))
        outs = pl.pallas_call(
            _decoder_kernel,
            grid=grid,
            in_specs=in_specs,
            out_specs=[out_spec, out_spec, out_spec],
            out_shape=out_shapes,
            compiler_params=pltpu.CompilerParams(
                dimension_semantics=("parallel",),
                vmem_limit_bytes=int(vmem_limit)),
            cost_estimate=cost,
        )(z_p, ws_p, wd_p, gvec, rowvec)
        jax.block_until_ready(outs)
        return outs

    try:
        px_scale_p, px_rate_p, px_dropout_p = _invoke(True)
    except Exception:
        # pl.Buffered(1) rejected on this JAX/libtpu combo -> default pipelining.
        px_scale_p, px_rate_p, px_dropout_p = _invoke(False)

    px_r = None
    if not trim_outputs:
        # Return padded (b_pad, g_pad) buffers; consumer slices lazily, avoiding
        # three extra full HBM copies when padding exists.
        return px_scale_p, px_r, px_rate_p, px_dropout_p

    px_scale = px_scale_p[:B, :n_out]
    px_rate = px_rate_p[:B, :n_out]
    px_dropout = px_dropout_p[:B, :n_out]
    return px_scale, px_r, px_rate, px_dropout


def _fold_batchnorm(gamma, beta, running_mean, running_var, eps=1e-3):
    """Fold eval-mode BatchNorm1d into per-feature (scale, shift)."""
    inv_std = 1.0 / jnp.sqrt(running_var + eps)
    scale = gamma * inv_std
    shift = beta - running_mean * scale
    return scale, shift


if __name__ == "__main__":
    key = jax.random.PRNGKey(0)
    B, n_input, n_output = 6, 30, 200   # deliberately unaligned -> exercises padding

    keys = jax.random.split(key, 12)
    z = jax.random.normal(keys[0], (B, n_input), dtype=jnp.float32)
    library = jax.random.normal(keys[1], (B, 1), dtype=jnp.float32) * 0.1
    cell_offset = jnp.abs(jax.random.normal(keys[2], (B,), dtype=jnp.float32)) + 0.5
    gene_offset = jnp.abs(jax.random.normal(keys[3], (n_output,), dtype=jnp.float32)) + 0.5

    # Linear weights (PyTorch Linear stores (out, in); we pass (in, out) = W.T)
    w_scale = jax.random.normal(keys[4], (n_input, n_output), dtype=jnp.float32) * 0.05
    w_dropout = jax.random.normal(keys[5], (n_input, n_output), dtype=jnp.float32) * 0.05

    # Deterministic BatchNorm1d parameters / running stats (eval mode).
    gamma_s = 1.0 + 0.1 * jax.random.normal(keys[6], (n_output,), dtype=jnp.float32)
    beta_s = 0.1 * jax.random.normal(keys[7], (n_output,), dtype=jnp.float32)
    mean_s = 0.05 * jax.random.normal(keys[8], (n_output,), dtype=jnp.float32)
    var_s = jnp.abs(jax.random.normal(keys[9], (n_output,), dtype=jnp.float32)) * 0.1 + 1.0

    gamma_d = 1.0 + 0.1 * jax.random.normal(keys[10], (n_output,), dtype=jnp.float32)
    beta_d = 0.1 * jax.random.normal(keys[11], (n_output,), dtype=jnp.float32)
    mean_d = jnp.zeros((n_output,), dtype=jnp.float32)
    var_d = jnp.ones((n_output,), dtype=jnp.float32)

    bn_s_scale, bn_s_shift = _fold_batchnorm(gamma_s, beta_s, mean_s, var_s)
    bn_d_scale, bn_d_shift = _fold_batchnorm(gamma_d, beta_d, mean_d, var_d)

    px_scale, px_r, px_rate, px_dropout = linear_decoder_scvi_gene_cell(
        z, w_scale, w_dropout, bn_s_scale, bn_s_shift, bn_d_scale, bn_d_shift,
        library, cell_offset, gene_offset)
    jax.block_until_ready((px_scale, px_rate, px_dropout))

    # --- pure-JAX reference (matching the kernel's bf16, BN-folded matmul) ----
    z_m = z.astype(jnp.bfloat16).astype(jnp.float32)
    ws_m = (w_scale * bn_s_scale).astype(jnp.bfloat16).astype(jnp.float32)
    wd_m = (w_dropout * bn_d_scale).astype(jnp.bfloat16).astype(jnp.float32)
    hi = jax.lax.Precision.HIGHEST
    raw_ref = jnp.dot(z_m, ws_m, precision=hi) + bn_s_shift
    px_scale_ref = jax.nn.softmax(raw_ref, axis=-1)
    px_dropout_ref = jnp.dot(z_m, wd_m, precision=hi) + bn_d_shift
    px_rate_ref = (jnp.exp(library) * cell_offset.reshape(B, 1)
                   * px_scale_ref * gene_offset.reshape(1, n_output))

    assert px_scale.shape == (B, n_output)
    assert jnp.allclose(px_scale, px_scale_ref, atol=1e-5, rtol=2e-3), "px_scale mismatch"
    assert jnp.allclose(px_dropout, px_dropout_ref, atol=1e-4, rtol=2e-3), "px_dropout mismatch"
    assert jnp.allclose(px_rate, px_rate_ref, atol=1e-5, rtol=2e-3), "px_rate mismatch"
    assert px_r is None

    print("KERNEL_OK")
</pallas_src>

<mosaic_0001>
module attributes {stable_mosaic.version = 11 : i64} {
  func.func @_decoder_kernel(%arg0: i32, %arg1: memref<8x32xbf16, #tpu.memory_space<vmem>>, %arg2: memref<32x256xbf16, #tpu.memory_space<vmem>>, %arg3: memref<32x256xbf16, #tpu.memory_space<vmem>>, %arg4: memref<8x256xf32, #tpu.memory_space<vmem>>, %arg5: memref<8x2xf32, #tpu.memory_space<vmem>>, %arg6: memref<8x256xf32, #tpu.memory_space<vmem>>, %arg7: memref<8x256xf32, #tpu.memory_space<vmem>>, %arg8: memref<8x256xf32, #tpu.memory_space<vmem>>) attributes {dimension_semantics = [#tpu.dimension_semantics<parallel>], iteration_bounds = array<i64: 1>, scalar_prefetch = 0 : i64, scratch_operands = 0 : i64, tpu.core_type = #tpu.core_type<tc>, window_params = [{transform_indices = @transform_0, window_bounds = array<i64: 8, 32>}, {pipeline_mode = #tpu.pipeline_mode<synchronous>, transform_indices = @transform_1, window_bounds = array<i64: 32, 256>}, {pipeline_mode = #tpu.pipeline_mode<synchronous>, transform_indices = @transform_2, window_bounds = array<i64: 32, 256>}, {pipeline_mode = #tpu.pipeline_mode<synchronous>, transform_indices = @transform_3, window_bounds = array<i64: 8, 256>}, {transform_indices = @transform_4, window_bounds = array<i64: 8, 2>}, {transform_indices = @transform_5, window_bounds = array<i64: 8, 256>}, {transform_indices = @transform_6, window_bounds = array<i64: 8, 256>}, {transform_indices = @transform_7, window_bounds = array<i64: 8, 256>}]} {
    %c0 = arith.constant 0 : index
    %c0_0 = arith.constant 0 : index
    %0 = vector.load %arg1[%c0, %c0_0] : memref<8x32xbf16, #tpu.memory_space<vmem>>, vector<8x32xbf16>
    %c0_1 = arith.constant 0 : index
    %c0_2 = arith.constant 0 : index
    %1 = vector.load %arg3[%c0_1, %c0_2] : memref<32x256xbf16, #tpu.memory_space<vmem>>, vector<32x256xbf16>
    %cst = arith.constant dense<0.000000e+00> : vector<8x256xf32>
    %2 = tpu.matmul %0, %1, %cst {dimension_numbers = #tpu.dot_dimension_numbers<[1], [0], [0], [1], [0, 0, 1, 1], [], []>} : vector<8x32xbf16>, vector<32x256xbf16>, vector<8x256xf32> -> vector<8x256xf32>
    %c1 = arith.constant 1 : index
    %c0_3 = arith.constant 0 : index
    %3 = vector.load %arg4[%c1, %c0_3] : memref<8x256xf32, #tpu.memory_space<vmem>>, vector<1x256xf32>
    %4 = vector.broadcast %3 : vector<1x256xf32> to vector<8x256xf32>
    %5 = arith.addf %2, %4 : vector<8x256xf32>
    %c0_4 = arith.constant 0 : index
    %c0_5 = arith.constant 0 : index
    %6 = vector.load %arg8[%c0_4, %c0_5] : memref<8x256xf32, #tpu.memory_space<vmem>>, vector<8x256xf32>
    tpu.vector_store %arg8[%c0_4, %c0_5], %5 {strides = array<i32>} : memref<8x256xf32, #tpu.memory_space<vmem>>, vector<8x256xf32>,
    %c0_6 = arith.constant 0 : index
    %c0_7 = arith.constant 0 : index
    %7 = vector.load %arg2[%c0_6, %c0_7] : memref<32x256xbf16, #tpu.memory_space<vmem>>, vector<32x256xbf16>
    %cst_8 = arith.constant dense<0.000000e+00> : vector<8x256xf32>
    %8 = tpu.matmul %0, %7, %cst_8 {dimension_numbers = #tpu.dot_dimension_numbers<[1], [0], [0], [1], [0, 0, 1, 1], [], []>} : vector<8x32xbf16>, vector<32x256xbf16>, vector<8x256xf32> -> vector<8x256xf32>
    %c0_9 = arith.constant 0 : index
    %c0_10 = arith.constant 0 : index
    %9 = vector.load %arg4[%c0_9, %c0_10] : memref<8x256xf32, #tpu.memory_space<vmem>>, vector<1x256xf32>
    %10 = vector.broadcast %9 : vector<1x256xf32> to vector<8x256xf32>
    %11 = arith.addf %8, %10 : vector<8x256xf32>
    %cst_11 = arith.constant dense<0xFF800000> : vector<8xf32>
    %12 = vector.multi_reduction <maximumf>, %11, %cst_11 [1] : vector<8x256xf32> to vector<8xf32>
    %13 = vector.shape_cast %12 : vector<8xf32> to vector<8x1xf32>
    %14 = vector.broadcast %13 : vector<8x1xf32> to vector<8x256xf32>
    %15 = arith.subf %11, %14 : vector<8x256xf32>
    %16 = math.exp %15 : vector<8x256xf32>
    %cst_12 = arith.constant dense<0.000000e+00> : vector<8xf32>
    %17 = vector.multi_reduction <add>, %16, %cst_12 [1] : vector<8x256xf32> to vector<8xf32>
    %18 = vector.shape_cast %17 : vector<8xf32> to vector<8x1xf32>
    %19 = tpu.reciprocal %18 : vector<8x1xf32> -> vector<8x1xf32>
    %20 = vector.broadcast %19 : vector<8x1xf32> to vector<8x256xf32>
    %21 = arith.mulf %16, %20 : vector<8x256xf32>
    %c0_13 = arith.constant 0 : index
    %c0_14 = arith.constant 0 : index
    %22 = vector.load %arg6[%c0_13, %c0_14] : memref<8x256xf32, #tpu.memory_space<vmem>>, vector<8x256xf32>
    tpu.vector_store %arg6[%c0_13, %c0_14], %21 {strides = array<i32>} : memref<8x256xf32, #tpu.memory_space<vmem>>, vector<8x256xf32>,
    %c0_15 = arith.constant 0 : index
    %c0_16 = arith.constant 0 : index
    %23 = vector.load %arg5[%c0_15, %c0_16] : memref<8x2xf32, #tpu.memory_space<vmem>>, vector<8x2xf32>
    %24 = vector.extract_strided_slice %23 {offsets = [0, 0], sizes = [8, 1], strides = [1, 1]} : vector<8x2xf32> to vector<8x1xf32>
    %25 = math.exp %24 : vector<8x1xf32>
    %26 = vector.extract_strided_slice %23 {offsets = [0, 1], sizes = [8, 1], strides = [1, 1]} : vector<8x2xf32> to vector<8x1xf32>
    %27 = arith.mulf %25, %26 : vector<8x1xf32>
    %28 = vector.broadcast %27 : vector<8x1xf32> to vector<8x256xf32>
    %29 = arith.mulf %21, %28 : vector<8x256xf32>
    %c2 = arith.constant 2 : index
    %c0_17 = arith.constant 0 : index
    %30 = vector.load %arg4[%c2, %c0_17] : memref<8x256xf32, #tpu.memory_space<vmem>>, vector<1x256xf32>
    %31 = vector.broadcast %30 : vector<1x256xf32> to vector<8x256xf32>
    %32 = arith.mulf %29, %31 : vector<8x256xf32>
    %c0_18 = arith.constant 0 : index
    %c0_19 = arith.constant 0 : index
    %33 = vector.load %arg7[%c0_18, %c0_19] : memref<8x256xf32, #tpu.memory_space<vmem>>, vector<8x256xf32>
    tpu.vector_store %arg7[%c0_18, %c0_19], %32 {strides = array<i32>} : memref<8x256xf32, #tpu.memory_space<vmem>>, vector<8x256xf32>,
    return
  }
  func.func @transform_0(%arg0: i32) -> (i32, i32) {
    %c0_i32 = arith.constant 0 : i32
    %c0_i32_0 = arith.constant 0 : i32
    return %arg0, %c0_i32 : i32, i32
  }
  func.func @transform_1(%arg0: i32) -> (i32, i32) {
    %c0_i32 = arith.constant 0 : i32
    %c0_i32_0 = arith.constant 0 : i32
    %c0_i32_1 = arith.constant 0 : i32
    return %c0_i32, %c0_i32_0 : i32, i32
  }
  func.func @transform_2(%arg0: i32) -> (i32, i32) {
    %c0_i32 = arith.constant 0 : i32
    %c0_i32_0 = arith.constant 0 : i32
    %c0_i32_1 = arith.constant 0 : i32
    return %c0_i32, %c0_i32_0 : i32, i32
  }
  func.func @transform_3(%arg0: i32) -> (i32, i32) {
    %c0_i32 = arith.constant 0 : i32
    %c0_i32_0 = arith.constant 0 : i32
    %c0_i32_1 = arith.constant 0 : i32
    return %c0_i32, %c0_i32_0 : i32, i32
  }
  func.func @transform_4(%arg0: i32) -> (i32, i32) {
    %c0_i32 = arith.constant 0 : i32
    %c0_i32_0 = arith.constant 0 : i32
    return %arg0, %c0_i32 : i32, i32
  }
  func.func @transform_5(%arg0: i32) -> (i32, i32) {
    %c0_i32 = arith.constant 0 : i32
    %c0_i32_0 = arith.constant 0 : i32
    return %arg0, %c0_i32 : i32, i32
  }
  func.func @transform_6(%arg0: i32) -> (i32, i32) {
    %c0_i32 = arith.constant 0 : i32
    %c0_i32_0 = arith.constant 0 : i32
    return %arg0, %c0_i32 : i32, i32
  }
  func.func @transform_7(%arg0: i32) -> (i32, i32) {
    %c0_i32 = arith.constant 0 : i32
    %c0_i32_0 = arith.constant 0 : i32
    return %arg0, %c0_i32 : i32, i32
  }
}

module attributes {stable_mosaic.version = 11 : i64} {
  func.func @_decoder_kernel(%arg0: i32, %arg1: memref<8x32xbf16, #tpu.memory_space<vmem>>, %arg2: memref<32x256xbf16, #tpu.memory_space<vmem>>, %arg3: memref<32x256xbf16, #tpu.memory_space<vmem>>, %arg4: memref<8x256xf32, #tpu.memory_space<vmem>>, %arg5: memref<8x2xf32, #tpu.memory_space<vmem>>, %arg6: memref<8x256xf32, #tpu.memory_space<vmem>>, %arg7: memref<8x256xf32, #tpu.memory_space<vmem>>, %arg8: memref<8x256xf32, #tpu.memory_space<vmem>>) attributes {dimension_semantics = [#tpu.dimension_semantics<parallel>], iteration_bounds = array<i64: 1>, scalar_prefetch = 0 : i64, scratch_operands = 0 : i64, tpu.core_type = #tpu.core_type<tc>, window_params = [{transform_indices = @transform_0, window_bounds = array<i64: 8, 32>}, {pipeline_mode = #tpu.pipeline_mode<synchronous>, transform_indices = @transform_1, window_bounds = array<i64: 32, 256>}, {pipeline_mode = #tpu.pipeline_mode<synchronous>, transform_indices = @transform_2, window_bounds = array<i64: 32, 256>}, {pipeline_mode = #tpu.pipeline_mode<synchronous>, transform_indices = @transform_3, window_bounds = array<i64: 8, 256>}, {transform_indices = @transform_4, window_bounds = array<i64: 8, 2>}, {transform_indices = @transform_5, window_bounds = array<i64: 8, 256>}, {transform_indices = @transform_6, window_bounds = array<i64: 8, 256>}, {transform_indices = @transform_7, window_bounds = array<i64: 8, 256>}]} {
    %c0 = arith.constant 0 : index
    %c0_0 = arith.constant 0 : index
    %0 = vector.load %arg1[%c0, %c0_0] : memref<8x32xbf16, #tpu.memory_space<vmem>>, vector<8x32xbf16>
    %c0_1 = arith.constant 0 : index
    %c0_2 = arith.constant 0 : index
    %1 = vector.load %arg3[%c0_1, %c0_2] : memref<32x256xbf16, #tpu.memory_space<vmem>>, vector<32x256xbf16>
    %cst = arith.constant dense<0.000000e+00> : vector<8x256xf32>
    %2 = tpu.matmul %0, %1, %cst {dimension_numbers = #tpu.dot_dimension_numbers<[1], [0], [0], [1], [0, 0, 1, 1], [], []>} : vector<8x32xbf16>, vector<32x256xbf16>, vector<8x256xf32> -> vector<8x256xf32>
    %c1 = arith.constant 1 : index
    %c0_3 = arith.constant 0 : index
    %3 = vector.load %arg4[%c1, %c0_3] : memref<8x256xf32, #tpu.memory_space<vmem>>, vector<1x256xf32>
    %4 = vector.broadcast %3 : vector<1x256xf32> to vector<8x256xf32>
    %5 = arith.addf %2, %4 : vector<8x256xf32>
    %c0_4 = arith.constant 0 : index
    %c0_5 = arith.constant 0 : index
    %6 = vector.load %arg8[%c0_4, %c0_5] : memref<8x256xf32, #tpu.memory_space<vmem>>, vector<8x256xf32>
    tpu.vector_store %arg8[%c0_4, %c0_5], %5 {strides = array<i32>} : memref<8x256xf32, #tpu.memory_space<vmem>>, vector<8x256xf32>,
    %c0_6 = arith.constant 0 : index
    %c0_7 = arith.constant 0 : index
    %7 = vector.load %arg2[%c0_6, %c0_7] : memref<32x256xbf16, #tpu.memory_space<vmem>>, vector<32x256xbf16>
    %cst_8 = arith.constant dense<0.000000e+00> : vector<8x256xf32>
    %8 = tpu.matmul %0, %7, %cst_8 {dimension_numbers = #tpu.dot_dimension_numbers<[1], [0], [0], [1], [0, 0, 1, 1], [], []>} : vector<8x32xbf16>, vector<32x256xbf16>, vector<8x256xf32> -> vector<8x256xf32>
    %c0_9 = arith.constant 0 : index
    %c0_10 = arith.constant 0 : index
    %9 = vector.load %arg4[%c0_9, %c0_10] : memref<8x256xf32, #tpu.memory_space<vmem>>, vector<1x256xf32>
    %10 = vector.broadcast %9 : vector<1x256xf32> to vector<8x256xf32>
    %11 = arith.addf %8, %10 : vector<8x256xf32>
    %cst_11 = arith.constant dense<0xFF800000> : vector<8xf32>
    %12 = vector.multi_reduction <maximumf>, %11, %cst_11 [1] : vector<8x256xf32> to vector<8xf32>
    %13 = vector.shape_cast %12 : vector<8xf32> to vector<8x1xf32>
    %14 = vector.broadcast %13 : vector<8x1xf32> to vector<8x256xf32>
    %15 = arith.subf %11, %14 : vector<8x256xf32>
    %16 = math.exp %15 : vector<8x256xf32>
    %cst_12 = arith.constant dense<0.000000e+00> : vector<8xf32>
    %17 = vector.multi_reduction <add>, %16, %cst_12 [1] : vector<8x256xf32> to vector<8xf32>
    %18 = vector.shape_cast %17 : vector<8xf32> to vector<8x1xf32>
    %19 = tpu.reciprocal %18 : vector<8x1xf32> -> vector<8x1xf32>
    %20 = vector.broadcast %19 : vector<8x1xf32> to vector<8x256xf32>
    %21 = arith.mulf %16, %20 : vector<8x256xf32>
    %c0_13 = arith.constant 0 : index
    %c0_14 = arith.constant 0 : index
    %22 = vector.load %arg6[%c0_13, %c0_14] : memref<8x256xf32, #tpu.memory_space<vmem>>, vector<8x256xf32>
    tpu.vector_store %arg6[%c0_13, %c0_14], %21 {strides = array<i32>} : memref<8x256xf32, #tpu.memory_space<vmem>>, vector<8x256xf32>,
    %c0_15 = arith.constant 0 : index
    %c0_16 = arith.constant 0 : index
    %23 = vector.load %arg5[%c0_15, %c0_16] : memref<8x2xf32, #tpu.memory_space<vmem>>, vector<8x2xf32>
    %24 = vector.extract_strided_slice %23 {offsets = [0, 0], sizes = [8, 1], strides = [1, 1]} : vector<8x2xf32> to vector<8x1xf32>
    %25 = math.exp %24 : vector<8x1xf32>
    %26 = vector.extract_strided_slice %23 {offsets = [0, 1], sizes = [8, 1], strides = [1, 1]} : vector<8x2xf32> to vector<8x1xf32>
    %27 = arith.mulf %25, %26 : vector<8x1xf32>
    %28 = vector.broadcast %27 : vector<8x1xf32> to vector<8x256xf32>
    %29 = arith.mulf %21, %28 : vector<8x256xf32>
    %c2 = arith.constant 2 : index
    %c0_17 = arith.constant 0 : index
    %30 = vector.load %arg4[%c2, %c0_17] : memref<8x256xf32, #tpu.memory_space<vmem>>, vector<1x256xf32>
    %31 = vector.broadcast %30 : vector<1x256xf32> to vector<8x256xf32>
    %32 = arith.mulf %29, %31 : vector<8x256xf32>
    %c0_18 = arith.constant 0 : index
    %c0_19 = arith.constant 0 : index
    %33 = vector.load %arg7[%c0_18, %c0_19] : memref<8x256xf32, #tpu.memory_space<vmem>>, vector<8x256xf32>
    tpu.vector_store %arg7[%c0_18, %c0_19], %32 {strides = array<i32>} : memref<8x256xf32, #tpu.memory_space<vmem>>, vector<8x256xf32>,
    return
  }
  func.func @transform_0(%arg0: i32) -> (i32, i32) {
    %c0_i32 = arith.constant 0 : i32
    %c0_i32_0 = arith.constant 0 : i32
    return %arg0, %c0_i32 : i32, i32
  }
  func.func @transform_1(%arg0: i32) -> (i32, i32) {
    %c0_i32 = arith.constant 0 : i32
    %c0_i32_0 = arith.constant 0 : i32
    %c0_i32_1 = arith.constant 0 : i32
    return %c0_i32, %c0_i32_0 : i32, i32
  }
  func.func @transform_2(%arg0: i32) -> (i32, i32) {
    %c0_i32 = arith.constant 0 : i32
    %c0_i32_0 = arith.constant 0 : i32
    %c0_i32_1 = arith.constant 0 : i32
    return %c0_i32, %c0_i32_0 : i32, i32
  }
  func.func @transform_3(%arg0: i32) -> (i32, i32) {
    %c0_i32 = arith.constant 0 : i32
    %c0_i32_0 = arith.constant 0 : i32
    %c0_i32_1 = arith.constant 0 : i32
    return %c0_i32, %c0_i32_0 : i32, i32
  }
  func.func @transform_4(%arg0: i32) -> (i32, i32) {
    %c0_i32 = arith.constant 0 : i32
    %c0_i32_0 = arith.constant 0 : i32
    return %arg0, %c0_i32 : i32, i32
  }
  func.func @transform_5(%arg0: i32) -> (i32, i32) {
    %c0_i32 = arith.constant 0 : i32
    %c0_i32_0 = arith.constant 0 : i32
    return %arg0, %c0_i32 : i32, i32
  }
  func.func @transform_6(%arg0: i32) -> (i32, i32) {
    %c0_i32 = arith.constant 0 : i32
    %c0_i32_0 = arith.constant 0 : i32
    return %arg0, %c0_i32 : i32, i32
  }
  func.func @transform_7(%arg0: i32) -> (i32, i32) {
    %c0_i32 = arith.constant 0 : i32
    %c0_i32_0 = arith.constant 0 : i32
    return %arg0, %c0_i32 : i32, i32
  }
}

</mosaic_0001>

<llo_original>
// kernel: tpu_custom_call.1
$region0: #{tpu_custom_call.1}
  #allocation0 [shape = 'u32[]', space=smem, size = 0x4, offset = 0x4, fixed_abs, tag = 'smem constant byte address 0x4 - core index']
  #allocation1 [shape = 'u32[144,128]{1,0:T(1,128)}', space=vmem, size = 0x12000, scoped, tag = 'internal scratch']
  %s0 = inlined_call_operand.vmem [shape: bf16[8,32], index: 0, kind: input, shape index: {}]
  %s1 = inlined_call_operand.hbm [shape: bf16[32,256], index: 1, kind: input, shape index: {}]
  %s2 = inlined_call_operand.hbm [shape: bf16[32,256], index: 2, kind: input, shape index: {}]
  %s3 = inlined_call_operand.hbm [shape: f32[8,256], index: 3, kind: input, shape index: {}]
  %s4 = inlined_call_operand.vmem [shape: f32[8,2], index: 4, kind: input, shape index: {}]
  %s5 = inlined_call_operand.hbm [shape: f32[8,256], index: 5, kind: output, shape index: {0}]
  %s6 = inlined_call_operand.hbm [shape: f32[8,256], index: 6, kind: output, shape index: {1}]
  %s7 = inlined_call_operand.hbm [shape: f32[8,256], index: 7, kind: output, shape index: {2}]
  %8 = xla_tuple %s5, %s6, %s7
  %s9 = sld [smem:[#allocation0]]
  $region58: #{tpu_custom_call.1} parent=0
    _
  %s11 = ssub.s32 1, %s9
  %s12 = scalar_select 0, %s11, %s9
  $region1: #{tpu_custom_call.1} parent=0
    #allocation2 [shape = 'u8[16384]{0}', space=vmem, size = 0x4000, scoped, tag = 'input window, operand 1, single buffered']
    #allocation3 [shape = 's32[1]{0}', space=sflag, size = 0x4, scoped, tag = 'scoped memory for tpu_custom_call.1']
    #allocation4 [shape = 's32[1]{0}', space=sflag, size = 0x4, scoped, tag = 'scoped memory for tpu_custom_call.1']
    #allocation5 [shape = 'u8[16384]{0}', space=vmem, size = 0x4000, scoped, tag = 'input window, operand 2, single buffered']
    #allocation6 [shape = 's32[1]{0}', space=sflag, size = 0x4, scoped, tag = 'scoped memory for tpu_custom_call.1']
    #allocation7 [shape = 'u8[8192]{0}', space=vmem, size = 0x2000, scoped, tag = 'input window, operand 3, single buffered']
    #allocation8 [shape = 'u8[8192]{0}', space=vmem, size = 0x2000, scoped, tag = 'output window, operand 0, single buffered']
    #allocation9 [shape = 'u8[8192]{0}', space=vmem, size = 0x2000, scoped, tag = 'output window, operand 1, single buffered']
    #allocation10 [shape = 's32[1]{0}', space=sflag, size = 0x4, scoped, tag = 'scoped memory for tpu_custom_call.1']
    #allocation11 [shape = 'u8[8192]{0}', space=vmem, size = 0x2000, scoped, tag = 'output window, operand 2, single buffered']
    %13 = vsyncpa [#allocation3], 0
    %14 = vsyncpa [#allocation6], 0
    %15 = vsyncpa [#allocation4], 0
    %16 = vsyncpa [#allocation10], 0
    // Predicated region
    $region2: #{tpu_custom_call.1} parent=1 // pred_check
      _
    $region3: #{tpu_custom_call.1} parent=1 // pred_check_branch
      %18 = sbr.rel (0) target = $region5
    $region4: #{tpu_custom_call.1} parent=1 // pred_region
      _
    $region5: #{tpu_custom_call.1} parent=1 // pred_fallthru
      _
    // Predicated region
    $region6: #{tpu_custom_call.1} parent=1 // pred_check
      _
    $region7: #{tpu_custom_call.1} parent=1 // pred_check_branch
      %20 = sbr.rel (0) target = $region9
    $region8: #{tpu_custom_call.1} parent=1 // pred_region
      %s22 = ssub.s32 512, 512
      %23 = vsyncadd [#allocation3], %s22
      %s24 = sshll.u32 [#allocation2], 4
      %s25 = int_to_ptr.vmem [resolvable:$true] %s24
      %30 = dma.hbm_to_vmem [thread:$0]  %s1, 512, %s25, [#allocation3], 128, 128, 8
    $region9: #{tpu_custom_call.1} parent=1 // pred_fallthru
      _
    // Predicated region
    $region10: #{tpu_custom_call.1} parent=1 // pred_check
      _
    $region11: #{tpu_custom_call.1} parent=1 // pred_check_branch
      %32 = sbr.rel (0) target = $region13
    $region12: #{tpu_custom_call.1} parent=1 // pred_region
      %s34 = ssub.s32 512, 512
      %35 = vsyncadd [#allocation6], %s34
      %s36 = sshll.u32 [#allocation5], 4
      %s37 = int_to_ptr.vmem [resolvable:$true] %s36
      %42 = dma.hbm_to_vmem [thread:$0]  %s2, 512, %s37, [#allocation6], 128, 128, 8
    $region13: #{tpu_custom_call.1} parent=1 // pred_fallthru
      _
    // Predicated region
    $region14: #{tpu_custom_call.1} parent=1 // pred_check
      _
    $region15: #{tpu_custom_call.1} parent=1 // pred_check_branch
      %44 = sbr.rel (0) target = $region17
    $region16: #{tpu_custom_call.1} parent=1 // pred_region
      %s46 = ssub.s32 256, 256
      %47 = vsyncadd [#allocation6], %s46
      %s49 = sshll.u32 [#allocation7], 4
      %s50 = int_to_ptr.vmem [resolvable:$true] %s49
      %52 = dma.hbm_to_vmem [thread:$0]  %s3, 256, %s50, [#allocation6]
    $region17: #{tpu_custom_call.1} parent=1 // pred_fallthru
      _
    // Predicated region
    $region18: #{tpu_custom_call.1} parent=1 // pred_check
      _
    $region19: #{tpu_custom_call.1} parent=1 // pred_check_branch
      %54 = sbr.rel (0) target = $region21
    $region20: #{tpu_custom_call.1} parent=1 // pred_region
      _
    $region21: #{tpu_custom_call.1} parent=1 // pred_fallthru
      _
    // Predicated region
    $region22: #{tpu_custom_call.1} parent=1 // pred_check
      _
    $region23: #{tpu_custom_call.1} parent=1 // pred_check_branch
      %56 = sbr.rel (0) target = $region25
    $region24: #{tpu_custom_call.1} parent=1 // pred_region
      %57 = dma.done [#allocation3], 512
    $region25: #{tpu_custom_call.1} parent=1 // pred_fallthru
      _
    // Predicated region
    $region26: #{tpu_custom_call.1} parent=1 // pred_check
      _
    $region27: #{tpu_custom_call.1} parent=1 // pred_check_branch
      %59 = sbr.rel (0) target = $region29
    $region28: #{tpu_custom_call.1} parent=1 // pred_region
      %60 = dma.done [#allocation6], 512
    $region29: #{tpu_custom_call.1} parent=1 // pred_fallthru
      _
    // Predicated region
    $region30: #{tpu_custom_call.1} parent=1 // pred_check
      _
    $region31: #{tpu_custom_call.1} parent=1 // pred_check_branch
      %62 = sbr.rel (0) target = $region33
    $region32: #{tpu_custom_call.1} parent=1 // pred_region
      %63 = dma.done [#allocation6], 256
    $region33: #{tpu_custom_call.1} parent=1 // pred_fallthru
      _
    %v65 = vld [vmem:[%s0] sm:$0xf]
    %v66 = vld [vmem:[#allocation5] sm:$0xff]
    %v67 = vld [vmem:[#allocation5 + $0x8] sm:$0xff]
    %v68 = vld [vmem:[#allocation5 + $0x10] sm:$0xff]
    %v69 = vld [vmem:[#allocation5 + $0x18] sm:$0xff]
    %s70 = scalar_lea.vmem [#allocation7], 1
    %v71 = vld [vmem:[%s70] ss:$8 sm:$0x3]
    %v73 = vlaneseq
    %v74 = vshrl.u32 %v73, 7
    %v75 = vsub.s32 0, %v74
    %v76 = vrot.slane %v71, %v75
    %v77 = vlaneseq
    %v78 = vshrl.u32 %v77, 7
    %v79 = vsub.s32 1, %v78
    %v80 = vrot.slane %v71, %v79
    %v87 = vunpack.c.l.b16 %v66
    %v88 = vunpack.c.h.b16 %v66
    %v89 = vunpack.c.l.b16 %v67
    %v90 = vunpack.c.h.b16 %v67
    %v91 = vunpack.c.l.b16 %v68
    %v92 = vunpack.c.h.b16 %v68
    %v93 = vunpack.c.l.b16 %v69
    %v94 = vunpack.c.h.b16 %v69
    %v95 = vpack.c.b16 %v89, %v87
    %v96 = vpack.c.b16 %v90, %v88
    %v97 = vpack.c.b16 %v93, %v91
    %v98 = vpack.c.b16 %v94, %v92
    %vm103 = vcmask 261120
    %v105 = vsel %vm103, %v65, 0
    %107 = vmatprep.subr.bf16.mxu0 0
    %108 = vmatpush1.bf16.msra.mxu0 0
    %109 = vmatprep.subr.bf16.mxu0 0
    %110 = vmatpush1.bf16.msra.mxu0 0
    %111 = vmatprep.subr.bf16.mxu0 0
    %112 = vmatpush1.bf16.msra.mxu0 0
    %113 = vmatprep.subr.bf16.mxu0 0
    %114 = vmatpush1.bf16.msra.mxu0 0
    %115 = vmatprep.subr.bf16.mxu0 0
    %116 = vmatpush1.bf16.msra.mxu0 0
    %117 = vmatprep.subr.bf16.mxu0 0
    %118 = vmatpush1.bf16.msra.mxu0 0
    %119 = vmatprep.subr.bf16.mxu0 %v98
    %120 = vmatpush1.bf16.msra.mxu0 %v97
    %121 = vmatprep.subr.bf16.mxu0 %v96
    %122 = vmatpush1.bf16.msra.mxu0 %v95
    %123 = vmatprep.subr.bf16.mxu0 0
    %124 = vmatpush2.bf16.msra.mxu0 0
    %125 = vmatprep.subr.bf16.mxu0 0
    %126 = vmatpush2.bf16.msra.mxu0 0
    %127 = vmatprep.subr.bf16.mxu0 0
    %128 = vmatpush2.bf16.msra.mxu0 0
    %129 = vmatprep.subr.bf16.mxu0 0
    %130 = vmatpush2.bf16.msra.mxu0 0
    %131 = vmatprep.subr.bf16.mxu0 0
    %132 = vmatpush2.bf16.msra.mxu0 0
    %133 = vmatprep.subr.bf16.mxu0 0
    %134 = vmatpush2.bf16.msra.mxu0 0
    %135 = vmatprep.subr.bf16.mxu0 0
    %136 = vmatpush2.bf16.msra.mxu0 0
    %137 = vmatprep.subr.bf16.mxu0 0
    %138 = vmatpush2.bf16.msra.mxu0 0
    %139 = vmatprep.mubr.bf16.mxu0 0
    %140 = vmatmul.mubr.bf16.gmra.mxu0 %v105
    %v141 = vpop.f32.mrf.mxu0
    %v142 = vadd.f32 %v76, %v141
    %v143 = vpop.f32.mrf.mxu0
    %v144 = vadd.f32 %v80, %v143
    %v145 = vpop.f32.mrf.mxu0
    %v146 = vpop.f32.mrf.mxu0
    %147 = vdwg.mxu0
    %148 = vst [vmem:[#allocation11] sm:$0xff] %v142
    %149 = vst [vmem:[#allocation11 + $0x8] sm:$0xff] %v144
    %v150 = vld [vmem:[#allocation2] sm:$0xff]
    %v151 = vld [vmem:[#allocation2 + $0x8] sm:$0xff]
    %v152 = vld [vmem:[#allocation2 + $0x10] sm:$0xff]
    %v153 = vld [vmem:[#allocation2 + $0x18] sm:$0xff]
    %v154 = vld [vmem:[#allocation7] ss:$8 sm:$0x3]
    %v156 = vlaneseq
    %v157 = vshrl.u32 %v156, 7
    %v158 = vsub.s32 0, %v157
    %v159 = vrot.slane %v154, %v158
    %v160 = vlaneseq
    %v161 = vshrl.u32 %v160, 7
    %v162 = vsub.s32 1, %v161
    %v163 = vrot.slane %v154, %v162
    %v170 = vunpack.c.l.b16 %v150
    %v171 = vunpack.c.h.b16 %v150
    %v172 = vunpack.c.l.b16 %v151
    %v173 = vunpack.c.h.b16 %v151
    %v174 = vunpack.c.l.b16 %v152
    %v175 = vunpack.c.h.b16 %v152
    %v176 = vunpack.c.l.b16 %v153
    %v177 = vunpack.c.h.b16 %v153
    %v178 = vpack.c.b16 %v172, %v170
    %v179 = vpack.c.b16 %v173, %v171
    %v180 = vpack.c.b16 %v176, %v174
    %v181 = vpack.c.b16 %v177, %v175
    %186 = vmatprep.subr.bf16.mxu0 0
    %187 = vmatpush1.bf16.msra.mxu0 0
    %188 = vmatprep.subr.bf16.mxu0 0
    %189 = vmatpush1.bf16.msra.mxu0 0
    %190 = vmatprep.subr.bf16.mxu0 0
    %191 = vmatpush1.bf16.msra.mxu0 0
    %192 = vmatprep.subr.bf16.mxu0 0
    %193 = vmatpush1.bf16.msra.mxu0 0
    %194 = vmatprep.subr.bf16.mxu0 0
    %195 = vmatpush1.bf16.msra.mxu0 0
    %196 = vmatprep.subr.bf16.mxu0 0
    %197 = vmatpush1.bf16.msra.mxu0 0
    %198 = vmatprep.subr.bf16.mxu0 %v181
    %199 = vmatpush1.bf16.msra.mxu0 %v180
    %200 = vmatprep.subr.bf16.mxu0 %v179
    %201 = vmatpush1.bf16.msra.mxu0 %v178
    %202 = vmatprep.subr.bf16.mxu0 0
    %203 = vmatpush2.bf16.msra.mxu0 0
    %204 = vmatprep.subr.bf16.mxu0 0
    %205 = vmatpush2.bf16.msra.mxu0 0
    %206 = vmatprep.subr.bf16.mxu0 0
    %207 = vmatpush2.bf16.msra.mxu0 0
    %208 = vmatprep.subr.bf16.mxu0 0
    %209 = vmatpush2.bf16.msra.mxu0 0
    %210 = vmatprep.subr.bf16.mxu0 0
    %211 = vmatpush2.bf16.msra.mxu0 0
    %212 = vmatprep.subr.bf16.mxu0 0
    %213 = vmatpush2.bf16.msra.mxu0 0
    %214 = vmatprep.subr.bf16.mxu0 0
    %215 = vmatpush2.bf16.msra.mxu0 0
    %216 = vmatprep.subr.bf16.mxu0 0
    %217 = vmatpush2.bf16.msra.mxu0 0
    %218 = vmatprep.mubr.bf16.mxu0 0
    %219 = vmatmul.mubr.bf16.gmra.mxu0 %v105
    %v220 = vpop.f32.mrf.mxu0
    %v221 = vadd.f32 %v159, %v220
    %v222 = vpop.f32.mrf.mxu0
    %v223 = vadd.f32 %v163, %v222
    %v224 = vpop.f32.mrf.mxu0
    %v225 = vpop.f32.mrf.mxu0
    %226 = vdwg.mxu0
    %v227 = vmax.f32 %v221, %v223
    %228 = vmax.xlane.f32.xlu0 %v227
    %v229 = vpop.xlane.xlu0 %228
    %v230 = vsub.f32 %v221, %v229
    %v231 = vsub.f32 %v223, %v229
    %v232 = vmul.f32 %v230, 1.442695
    %v233 = vpow.pop %v232
    %v234 = vmul.f32 %v231, 1.442695
    %v235 = vpow.pop %v234
    %v236 = vadd.f32 %v233, %v235
    %237 = vadd.xlane.f32.xlu0 %v236
    %v238 = vpop.xlane.xlu0 %237
    %v239 = vrcp.pop %v238
    %v240 = vmul.f32 %v233, %v239
    %v241 = vmul.f32 %v235, %v239
    %242 = vst [vmem:[#allocation8] sm:$0xff] %v240
    %243 = vst [vmem:[#allocation8 + $0x8] sm:$0xff] %v241
    %v244 = vld [vmem:[%s4] sm:$0xff]
    %v245 = vmul.f32 %v244, 1.442695
    %v246 = vpow.pop %v245
    %248 = vrot.lane.b32.xlu0 %v244, 127
    %v249 = vpop.permute.xlu0 %248
    %v251 = vmul.f32 %v246, %v249
    %253 = vset.pattern.permute.xlu0 0
    %254 = vperm.xlu0 %253, %v251
    %v255 = vpop.permute.xlu0 %254
    %v257 = vmul.f32 %v240, %v255
    %v258 = vmul.f32 %v241, %v255
    %s259 = scalar_lea.vmem [#allocation7], 2
    %v260 = vld [vmem:[%s259] ss:$8 sm:$0x3]
    %v262 = vlaneseq
    %v263 = vshrl.u32 %v262, 7
    %v264 = vsub.s32 0, %v263
    %v265 = vrot.slane %v260, %v264
    %v266 = vlaneseq
    %v267 = vshrl.u32 %v266, 7
    %v268 = vsub.s32 1, %v267
    %v269 = vrot.slane %v260, %v268
    %v272 = vmul.f32 %v257, %v265
    %v273 = vmul.f32 %v258, %v269
    %274 = vst [vmem:[#allocation9] sm:$0xff] %v272
    %275 = vst [vmem:[#allocation9 + $0x8] sm:$0xff] %v273
    // Predicated region
    $region34: #{tpu_custom_call.1} parent=1 // pred_check
      _
    $region35: #{tpu_custom_call.1} parent=1 // pred_check_branch
      %277 = sbr.rel (0) target = $region37
    $region36: #{tpu_custom_call.1} parent=1 // pred_region
      %s279 = ssub.s32 256, 256
      %280 = vsyncadd [#allocation4], %s279
      %s282 = sshll.u32 [#allocation8], 4
      %s283 = int_to_ptr.vmem [resolvable:$true] %s282
      %285 = dma.vmem_to_hbm [thread:$0]  %s283, 256, %s5, [#allocation4]
    $region37: #{tpu_custom_call.1} parent=1 // pred_fallthru
      _
    // Predicated region
    $region38: #{tpu_custom_call.1} parent=1 // pred_check
      _
    $region39: #{tpu_custom_call.1} parent=1 // pred_check_branch
      %287 = sbr.rel (0) target = $region41
    $region40: #{tpu_custom_call.1} parent=1 // pred_region
      %s289 = ssub.s32 256, 256
      %290 = vsyncadd [#allocation10], %s289
      %s292 = sshll.u32 [#allocation9], 4
      %s293 = int_to_ptr.vmem [resolvable:$true] %s292
      %295 = dma.vmem_to_hbm [thread:$0]  %s293, 256, %s6, [#allocation10]
    $region41: #{tpu_custom_call.1} parent=1 // pred_fallthru
      _
    // Predicated region
    $region42: #{tpu_custom_call.1} parent=1 // pred_check
      _
    $region43: #{tpu_custom_call.1} parent=1 // pred_check_branch
      %297 = sbr.rel (0) target = $region45
    $region44: #{tpu_custom_call.1} parent=1 // pred_region
      %s299 = ssub.s32 256, 256
      %300 = vsyncadd [#allocation10], %s299
      %s302 = sshll.u32 [#allocation11], 4
      %s303 = int_to_ptr.vmem [resolvable:$true] %s302
      %305 = dma.vmem_to_hbm [thread:$0]  %s303, 256, %s7, [#allocation10]
    $region45: #{tpu_custom_call.1} parent=1 // pred_fallthru
      _
    // Predicated region
    $region46: #{tpu_custom_call.1} parent=1 // pred_check
      _
    $region47: #{tpu_custom_call.1} parent=1 // pred_check_branch
      %307 = sbr.rel (0) target = $region49
    $region48: #{tpu_custom_call.1} parent=1 // pred_region
      %308 = dma.done [#allocation4], 256
    $region49: #{tpu_custom_call.1} parent=1 // pred_fallthru
      _
    // Predicated region
    $region50: #{tpu_custom_call.1} parent=1 // pred_check
      _
    $region51: #{tpu_custom_call.1} parent=1 // pred_check_branch
      %310 = sbr.rel (0) target = $region53
    $region52: #{tpu_custom_call.1} parent=1 // pred_region
      %311 = dma.done [#allocation10], 256
    $region53: #{tpu_custom_call.1} parent=1 // pred_fallthru
      _
    // Predicated region
    $region54: #{tpu_custom_call.1} parent=1 // pred_check
      _
    $region55: #{tpu_custom_call.1} parent=1 // pred_check_branch
      %313 = sbr.rel (0) target = $region57
    $region56: #{tpu_custom_call.1} parent=1 // pred_region
      %314 = dma.done [#allocation10], 256
    $region57: #{tpu_custom_call.1} parent=1 // pred_fallthru
      _
    %315 = vsyncpa [#allocation3], 1
    %316 = vsyncpa [#allocation6], 1
    %317 = vsyncpa [#allocation4], 1
    %318 = vsyncpa [#allocation10], 1

// kernel: tpu_custom_call.1
$region0: #{tpu_custom_call.1}
  #allocation0 [shape = 'u32[]', space=smem, size = 0x4, offset = 0x4, fixed_abs, tag = 'smem constant byte address 0x4 - core index']
  #allocation1 [shape = 'u32[144,128]{1,0:T(1,128)}', space=vmem, size = 0x12000, scoped, tag = 'internal scratch']
  %s0 = inlined_call_operand.vmem [shape: bf16[8,32], index: 0, kind: input, shape index: {}]
  %s1 = inlined_call_operand.hbm [shape: bf16[32,256], index: 1, kind: input, shape index: {}]
  %s2 = inlined_call_operand.hbm [shape: bf16[32,256], index: 2, kind: input, shape index: {}]
  %s3 = inlined_call_operand.hbm [shape: f32[8,256], index: 3, kind: input, shape index: {}]
  %s4 = inlined_call_operand.vmem [shape: f32[8,2], index: 4, kind: input, shape index: {}]
  %s5 = inlined_call_operand.hbm [shape: f32[8,256], index: 5, kind: output, shape index: {0}]
  %s6 = inlined_call_operand.hbm [shape: f32[8,256], index: 6, kind: output, shape index: {1}]
  %s7 = inlined_call_operand.hbm [shape: f32[8,256], index: 7, kind: output, shape index: {2}]
  %8 = xla_tuple %s5, %s6, %s7
  %s9 = sld [smem:[#allocation0]]
  $region58: #{tpu_custom_call.1} parent=0
    _
  %s11 = ssub.s32 1, %s9
  %s12 = scalar_select 0, %s11, %s9
  $region1: #{tpu_custom_call.1} parent=0
    #allocation2 [shape = 'u8[16384]{0}', space=vmem, size = 0x4000, scoped, tag = 'input window, operand 1, single buffered']
    #allocation3 [shape = 's32[1]{0}', space=sflag, size = 0x4, scoped, tag = 'scoped memory for tpu_custom_call.1']
    #allocation4 [shape = 's32[1]{0}', space=sflag, size = 0x4, scoped, tag = 'scoped memory for tpu_custom_call.1']
    #allocation5 [shape = 'u8[16384]{0}', space=vmem, size = 0x4000, scoped, tag = 'input window, operand 2, single buffered']
    #allocation6 [shape = 's32[1]{0}', space=sflag, size = 0x4, scoped, tag = 'scoped memory for tpu_custom_call.1']
    #allocation7 [shape = 'u8[8192]{0}', space=vmem, size = 0x2000, scoped, tag = 'input window, operand 3, single buffered']
    #allocation8 [shape = 'u8[8192]{0}', space=vmem, size = 0x2000, scoped, tag = 'output window, operand 0, single buffered']
    #allocation9 [shape = 'u8[8192]{0}', space=vmem, size = 0x2000, scoped, tag = 'output window, operand 1, single buffered']
    #allocation10 [shape = 's32[1]{0}', space=sflag, size = 0x4, scoped, tag = 'scoped memory for tpu_custom_call.1']
    #allocation11 [shape = 'u8[8192]{0}', space=vmem, size = 0x2000, scoped, tag = 'output window, operand 2, single buffered']
    %13 = vsyncpa [#allocation3], 0
    %14 = vsyncpa [#allocation6], 0
    %15 = vsyncpa [#allocation4], 0
    %16 = vsyncpa [#allocation10], 0
    // Predicated region
    $region2: #{tpu_custom_call.1} parent=1 // pred_check
      _
    $region3: #{tpu_custom_call.1} parent=1 // pred_check_branch
      %18 = sbr.rel (0) target = $region5
    $region4: #{tpu_custom_call.1} parent=1 // pred_region
      _
    $region5: #{tpu_custom_call.1} parent=1 // pred_fallthru
      _
    // Predicated region
    $region6: #{tpu_custom_call.1} parent=1 // pred_check
      _
    $region7: #{tpu_custom_call.1} parent=1 // pred_check_branch
      %20 = sbr.rel (0) target = $region9
    $region8: #{tpu_custom_call.1} parent=1 // pred_region
      %s22 = ssub.s32 512, 512
      %23 = vsyncadd [#allocation3], %s22
      %s24 = sshll.u32 [#allocation2], 4
      %s25 = int_to_ptr.vmem [resolvable:$true] %s24
      %30 = dma.hbm_to_vmem [thread:$0]  %s1, 512, %s25, [#allocation3], 128, 128, 8
    $region9: #{tpu_custom_call.1} parent=1 // pred_fallthru
      _
    // Predicated region
    $region10: #{tpu_custom_call.1} parent=1 // pred_check
      _
    $region11: #{tpu_custom_call.1} parent=1 // pred_check_branch
      %32 = sbr.rel (0) target = $region13
    $region12: #{tpu_custom_call.1} parent=1 // pred_region
      %s34 = ssub.s32 512, 512
      %35 = vsyncadd [#allocation6], %s34
      %s36 = sshll.u32 [#allocation5], 4
      %s37 = int_to_ptr.vmem [resolvable:$true] %s36
      %42 = dma.hbm_to_vmem [thread:$0]  %s2, 512, %s37, [#allocation6], 128, 128, 8
    $region13: #{tpu_custom_call.1} parent=1 // pred_fallthru
      _
    // Predicated region
    $region14: #{tpu_custom_call.1} parent=1 // pred_check
      _
    $region15: #{tpu_custom_call.1} parent=1 // pred_check_branch
      %44 = sbr.rel (0) target = $region17
    $region16: #{tpu_custom_call.1} parent=1 // pred_region
      %s46 = ssub.s32 256, 256
      %47 = vsyncadd [#allocation6], %s46
      %s49 = sshll.u32 [#allocation7], 4
      %s50 = int_to_ptr.vmem [resolvable:$true] %s49
      %52 = dma.hbm_to_vmem [thread:$0]  %s3, 256, %s50, [#allocation6]
    $region17: #{tpu_custom_call.1} parent=1 // pred_fallthru
      _
    // Predicated region
    $region18: #{tpu_custom_call.1} parent=1 // pred_check
      _
    $region19: #{tpu_custom_call.1} parent=1 // pred_check_branch
      %54 = sbr.rel (0) target = $region21
    $region20: #{tpu_custom_call.1} parent=1 // pred_region
      _
    $region21: #{tpu_custom_call.1} parent=1 // pred_fallthru
      _
    // Predicated region
    $region22: #{tpu_custom_call.1} parent=1 // pred_check
      _
    $region23: #{tpu_custom_call.1} parent=1 // pred_check_branch
      %56 = sbr.rel (0) target = $region25
    $region24: #{tpu_custom_call.1} parent=1 // pred_region
      %57 = dma.done [#allocation3], 512
    $region25: #{tpu_custom_call.1} parent=1 // pred_fallthru
      _
    // Predicated region
    $region26: #{tpu_custom_call.1} parent=1 // pred_check
      _
    $region27: #{tpu_custom_call.1} parent=1 // pred_check_branch
      %59 = sbr.rel (0) target = $region29
    $region28: #{tpu_custom_call.1} parent=1 // pred_region
      %60 = dma.done [#allocation6], 512
    $region29: #{tpu_custom_call.1} parent=1 // pred_fallthru
      _
    // Predicated region
    $region30: #{tpu_custom_call.1} parent=1 // pred_check
      _
    $region31: #{tpu_custom_call.1} parent=1 // pred_check_branch
      %62 = sbr.rel (0) target = $region33
    $region32: #{tpu_custom_call.1} parent=1 // pred_region
      %63 = dma.done [#allocation6], 256
    $region33: #{tpu_custom_call.1} parent=1 // pred_fallthru
      _
    %v65 = vld [vmem:[%s0] sm:$0xf]
    %v66 = vld [vmem:[#allocation5] sm:$0xff]
    %v67 = vld [vmem:[#allocation5 + $0x8] sm:$0xff]
    %v68 = vld [vmem:[#allocation5 + $0x10] sm:$0xff]
    %v69 = vld [vmem:[#allocation5 + $0x18] sm:$0xff]
    %s70 = scalar_lea.vmem [#allocation7], 1
    %v71 = vld [vmem:[%s70] ss:$8 sm:$0x3]
    %v73 = vlaneseq
    %v74 = vshrl.u32 %v73, 7
    %v75 = vsub.s32 0, %v74
    %v76 = vrot.slane %v71, %v75
    %v77 = vlaneseq
    %v78 = vshrl.u32 %v77, 7
    %v79 = vsub.s32 1, %v78
    %v80 = vrot.slane %v71, %v79
    %v87 = vunpack.c.l.b16 %v66
    %v88 = vunpack.c.h.b16 %v66
    %v89 = vunpack.c.l.b16 %v67
    %v90 = vunpack.c.h.b16 %v67
    %v91 = vunpack.c.l.b16 %v68
    %v92 = vunpack.c.h.b16 %v68
    %v93 = vunpack.c.l.b16 %v69
    %v94 = vunpack.c.h.b16 %v69
    %v95 = vpack.c.b16 %v89, %v87
    %v96 = vpack.c.b16 %v90, %v88
    %v97 = vpack.c.b16 %v93, %v91
    %v98 = vpack.c.b16 %v94, %v92
    %vm103 = vcmask 261120
    %v105 = vsel %vm103, %v65, 0
    %107 = vmatprep.subr.bf16.mxu0 0
    %108 = vmatpush1.bf16.msra.mxu0 0
    %109 = vmatprep.subr.bf16.mxu0 0
    %110 = vmatpush1.bf16.msra.mxu0 0
    %111 = vmatprep.subr.bf16.mxu0 0
    %112 = vmatpush1.bf16.msra.mxu0 0
    %113 = vmatprep.subr.bf16.mxu0 0
    %114 = vmatpush1.bf16.msra.mxu0 0
    %115 = vmatprep.subr.bf16.mxu0 0
    %116 = vmatpush1.bf16.msra.mxu0 0
    %117 = vmatprep.subr.bf16.mxu0 0
    %118 = vmatpush1.bf16.msra.mxu0 0
    %119 = vmatprep.subr.bf16.mxu0 %v98
    %120 = vmatpush1.bf16.msra.mxu0 %v97
    %121 = vmatprep.subr.bf16.mxu0 %v96
    %122 = vmatpush1.bf16.msra.mxu0 %v95
    %123 = vmatprep.subr.bf16.mxu0 0
    %124 = vmatpush2.bf16.msra.mxu0 0
    %125 = vmatprep.subr.bf16.mxu0 0
    %126 = vmatpush2.bf16.msra.mxu0 0
    %127 = vmatprep.subr.bf16.mxu0 0
    %128 = vmatpush2.bf16.msra.mxu0 0
    %129 = vmatprep.subr.bf16.mxu0 0
    %130 = vmatpush2.bf16.msra.mxu0 0
    %131 = vmatprep.subr.bf16.mxu0 0
    %132 = vmatpush2.bf16.msra.mxu0 0
    %133 = vmatprep.subr.bf16.mxu0 0
    %134 = vmatpush2.bf16.msra.mxu0 0
    %135 = vmatprep.subr.bf16.mxu0 0
    %136 = vmatpush2.bf16.msra.mxu0 0
    %137 = vmatprep.subr.bf16.mxu0 0
    %138 = vmatpush2.bf16.msra.mxu0 0
    %139 = vmatprep.mubr.bf16.mxu0 0
    %140 = vmatmul.mubr.bf16.gmra.mxu0 %v105
    %v141 = vpop.f32.mrf.mxu0
    %v142 = vadd.f32 %v76, %v141
    %v143 = vpop.f32.mrf.mxu0
    %v144 = vadd.f32 %v80, %v143
    %v145 = vpop.f32.mrf.mxu0
    %v146 = vpop.f32.mrf.mxu0
    %147 = vdwg.mxu0
    %148 = vst [vmem:[#allocation11] sm:$0xff] %v142
    %149 = vst [vmem:[#allocation11 + $0x8] sm:$0xff] %v144
    %v150 = vld [vmem:[#allocation2] sm:$0xff]
    %v151 = vld [vmem:[#allocation2 + $0x8] sm:$0xff]
    %v152 = vld [vmem:[#allocation2 + $0x10] sm:$0xff]
    %v153 = vld [vmem:[#allocation2 + $0x18] sm:$0xff]
    %v154 = vld [vmem:[#allocation7] ss:$8 sm:$0x3]
    %v156 = vlaneseq
    %v157 = vshrl.u32 %v156, 7
    %v158 = vsub.s32 0, %v157
    %v159 = vrot.slane %v154, %v158
    %v160 = vlaneseq
    %v161 = vshrl.u32 %v160, 7
    %v162 = vsub.s32 1, %v161
    %v163 = vrot.slane %v154, %v162
    %v170 = vunpack.c.l.b16 %v150
    %v171 = vunpack.c.h.b16 %v150
    %v172 = vunpack.c.l.b16 %v151
    %v173 = vunpack.c.h.b16 %v151
    %v174 = vunpack.c.l.b16 %v152
    %v175 = vunpack.c.h.b16 %v152
    %v176 = vunpack.c.l.b16 %v153
    %v177 = vunpack.c.h.b16 %v153
    %v178 = vpack.c.b16 %v172, %v170
    %v179 = vpack.c.b16 %v173, %v171
    %v180 = vpack.c.b16 %v176, %v174
    %v181 = vpack.c.b16 %v177, %v175
    %186 = vmatprep.subr.bf16.mxu0 0
    %187 = vmatpush1.bf16.msra.mxu0 0
    %188 = vmatprep.subr.bf16.mxu0 0
    %189 = vmatpush1.bf16.msra.mxu0 0
    %190 = vmatprep.subr.bf16.mxu0 0
    %191 = vmatpush1.bf16.msra.mxu0 0
    %192 = vmatprep.subr.bf16.mxu0 0
    %193 = vmatpush1.bf16.msra.mxu0 0
    %194 = vmatprep.subr.bf16.mxu0 0
    %195 = vmatpush1.bf16.msra.mxu0 0
    %196 = vmatprep.subr.bf16.mxu0 0
    %197 = vmatpush1.bf16.msra.mxu0 0
    %198 = vmatprep.subr.bf16.mxu0 %v181
    %199 = vmatpush1.bf16.msra.mxu0 %v180
    %200 = vmatprep.subr.bf16.mxu0 %v179
    %201 = vmatpush1.bf16.msra.mxu0 %v178
    %202 = vmatprep.subr.bf16.mxu0 0
    %203 = vmatpush2.bf16.msra.mxu0 0
    %204 = vmatprep.subr.bf16.mxu0 0
    %205 = vmatpush2.bf16.msra.mxu0 0
    %206 = vmatprep.subr.bf16.mxu0 0
    %207 = vmatpush2.bf16.msra.mxu0 0
    %208 = vmatprep.subr.bf16.mxu0 0
    %209 = vmatpush2.bf16.msra.mxu0 0
    %210 = vmatprep.subr.bf16.mxu0 0
    %211 = vmatpush2.bf16.msra.mxu0 0
    %212 = vmatprep.subr.bf16.mxu0 0
    %213 = vmatpush2.bf16.msra.mxu0 0
    %214 = vmatprep.subr.bf16.mxu0 0
    %215 = vmatpush2.bf16.msra.mxu0 0
    %216 = vmatprep.subr.bf16.mxu0 0
    %217 = vmatpush2.bf16.msra.mxu0 0
    %218 = vmatprep.mubr.bf16.mxu0 0
    %219 = vmatmul.mubr.bf16.gmra.mxu0 %v105
    %v220 = vpop.f32.mrf.mxu0
    %v221 = vadd.f32 %v159, %v220
    %v222 = vpop.f32.mrf.mxu0
    %v223 = vadd.f32 %v163, %v222
    %v224 = vpop.f32.mrf.mxu0
    %v225 = vpop.f32.mrf.mxu0
    %226 = vdwg.mxu0
    %v227 = vmax.f32 %v221, %v223
    %228 = vmax.xlane.f32.xlu0 %v227
    %v229 = vpop.xlane.xlu0 %228
    %v230 = vsub.f32 %v221, %v229
    %v231 = vsub.f32 %v223, %v229
    %v232 = vmul.f32 %v230, 1.442695
    %v233 = vpow.pop %v232
    %v234 = vmul.f32 %v231, 1.442695
    %v235 = vpow.pop %v234
    %v236 = vadd.f32 %v233, %v235
    %237 = vadd.xlane.f32.xlu0 %v236
    %v238 = vpop.xlane.xlu0 %237
    %v239 = vrcp.pop %v238
    %v240 = vmul.f32 %v233, %v239
    %v241 = vmul.f32 %v235, %v239
    %242 = vst [vmem:[#allocation8] sm:$0xff] %v240
    %243 = vst [vmem:[#allocation8 + $0x8] sm:$0xff] %v241
    %v244 = vld [vmem:[%s4] sm:$0xff]
    %v245 = vmul.f32 %v244, 1.442695
    %v246 = vpow.pop %v245
    %248 = vrot.lane.b32.xlu0 %v244, 127
    %v249 = vpop.permute.xlu0 %248
    %v251 = vmul.f32 %v246, %v249
    %253 = vset.pattern.permute.xlu0 0
    %254 = vperm.xlu0 %253, %v251
    %v255 = vpop.permute.xlu0 %254
    %v257 = vmul.f32 %v240, %v255
    %v258 = vmul.f32 %v241, %v255
    %s259 = scalar_lea.vmem [#allocation7], 2
    %v260 = vld [vmem:[%s259] ss:$8 sm:$0x3]
    %v262 = vlaneseq
    %v263 = vshrl.u32 %v262, 7
    %v264 = vsub.s32 0, %v263
    %v265 = vrot.slane %v260, %v264
    %v266 = vlaneseq
    %v267 = vshrl.u32 %v266, 7
    %v268 = vsub.s32 1, %v267
    %v269 = vrot.slane %v260, %v268
    %v272 = vmul.f32 %v257, %v265
    %v273 = vmul.f32 %v258, %v269
    %274 = vst [vmem:[#allocation9] sm:$0xff] %v272
    %275 = vst [vmem:[#allocation9 + $0x8] sm:$0xff] %v273
    // Predicated region
    $region34: #{tpu_custom_call.1} parent=1 // pred_check
      _
    $region35: #{tpu_custom_call.1} parent=1 // pred_check_branch
      %277 = sbr.rel (0) target = $region37
    $region36: #{tpu_custom_call.1} parent=1 // pred_region
      %s279 = ssub.s32 256, 256
      %280 = vsyncadd [#allocation4], %s279
      %s282 = sshll.u32 [#allocation8], 4
      %s283 = int_to_ptr.vmem [resolvable:$true] %s282
      %285 = dma.vmem_to_hbm [thread:$0]  %s283, 256, %s5, [#allocation4]
    $region37: #{tpu_custom_call.1} parent=1 // pred_fallthru
      _
    // Predicated region
    $region38: #{tpu_custom_call.1} parent=1 // pred_check
      _
    $region39: #{tpu_custom_call.1} parent=1 // pred_check_branch
      %287 = sbr.rel (0) target = $region41
    $region40: #{tpu_custom_call.1} parent=1 // pred_region
      %s289 = ssub.s32 256, 256
      %290 = vsyncadd [#allocation10], %s289
      %s292 = sshll.u32 [#allocation9], 4
      %s293 = int_to_ptr.vmem [resolvable:$true] %s292
      %295 = dma.vmem_to_hbm [thread:$0]  %s293, 256, %s6, [#allocation10]
    $region41: #{tpu_custom_call.1} parent=1 // pred_fallthru
      _
    // Predicated region
    $region42: #{tpu_custom_call.1} parent=1 // pred_check
      _
    $region43: #{tpu_custom_call.1} parent=1 // pred_check_branch
      %297 = sbr.rel (0) target = $region45
    $region44: #{tpu_custom_call.1} parent=1 // pred_region
      %s299 = ssub.s32 256, 256
      %300 = vsyncadd [#allocation10], %s299
      %s302 = sshll.u32 [#allocation11], 4
      %s303 = int_to_ptr.vmem [resolvable:$true] %s302
      %305 = dma.vmem_to_hbm [thread:$0]  %s303, 256, %s7, [#allocation10]
    $region45: #{tpu_custom_call.1} parent=1 // pred_fallthru
      _
    // Predicated region
    $region46: #{tpu_custom_call.1} parent=1 // pred_check
      _
    $region47: #{tpu_custom_call.1} parent=1 // pred_check_branch
      %307 = sbr.rel (0) target = $region49
    $region48: #{tpu_custom_call.1} parent=1 // pred_region
      %308 = dma.done [#allocation4], 256
    $region49: #{tpu_custom_call.1} parent=1 // pred_fallthru
      _
    // Predicated region
    $region50: #{tpu_custom_call.1} parent=1 // pred_check
      _
    $region51: #{tpu_custom_call.1} parent=1 // pred_check_branch
      %310 = sbr.rel (0) target = $region53
    $region52: #{tpu_custom_call.1} parent=1 // pred_region
      %311 = dma.done [#allocation10], 256
    $region53: #{tpu_custom_call.1} parent=1 // pred_fallthru
      _
    // Predicated region
    $region54: #{tpu_custom_call.1} parent=1 // pred_check
      _
    $region55: #{tpu_custom_call.1} parent=1 // pred_check_branch
      %313 = sbr.rel (0) target = $region57
    $region56: #{tpu_custom_call.1} parent=1 // pred_region
      %314 = dma.done [#allocation10], 256
    $region57: #{tpu_custom_call.1} parent=1 // pred_fallthru
      _
    %315 = vsyncpa [#allocation3], 1
    %316 = vsyncpa [#allocation6], 1
    %317 = vsyncpa [#allocation4], 1
    %318 = vsyncpa [#allocation10], 1

</llo_original>
